<compile_context>
chip_gen: v7x
topology: tpu7x:2x2x1
jax: 0.10.0
libtpu: 0.0.40
codegen_flags: <defaults>
</compile_context>

<pallas_src>
import functools

import jax
import jax.numpy as jnp
from jax import lax
from jax.experimental import pallas as pl
from jax.experimental.pallas import tpu as pltpu


# --------------------------------------------------------------------------
# Fused MDSA kernel (Bt frames, lane-folded, per grid step)
# --------------------------------------------------------------------------
def _mdsa_kernel(x_ref, masks_ref, wconv_ref, bconv_ref, aconv_ref,
                 wf_ref, bf_ref, af_ref, bs_ref, out_ref, *, img_w):
    # x_ref    : (C, N)        channels on sublanes, N = Bt*H*W on lanes.
    # masks_ref: (9C, N)       border masks, pre-broadcast over channels and
    #                          tiled per frame.
    # wconv_ref: (3, C+1, 9C)  stacked conv weights; row C of layer 0 is the
    #                          spatial-attention 1x1 weight at the centre tap
    #                          (rows C of layers 1/2 are zero / unused).
    # bconv_ref: (3, C, 1)     conv biases.
    # aconv_ref: (3, C, 1)     PReLU slopes.
    # wf_ref   : (C, 3C)       1x1 fuse conv weight (applied to [f1;f2;f3]).
    # bf_ref   : (C, 1)        fuse bias.
    # af_ref   : (C, 1)        fuse PReLU slope.
    # bs_ref   : (1, 1)        spatial-attention bias.
    # out_ref  : (C, N)
    c, n = x_ref.shape
    x = x_ref[...]
    mask = masks_ref[...]                                # (9C, N)

    def conv_stack(inp, layer):
        # 3x3 conv, stride 1, zero-pad 1: 9 static lane-rolls (XLU), one big
        # mask multiply (VPU), ONE (C+1, 9C) x (9C, N) MXU matmul.
        taps = []
        for t in range(9):
            dy = t // 3 - 1
            dx = t % 3 - 1
            shift = (-(dy * img_w + dx)) % n
            taps.append(inp if shift == 0
                        else pltpu.roll(inp, shift=shift, axis=1))
        stack = jnp.concatenate(taps, axis=0) * mask     # (9C, N)
        return jnp.dot(wconv_ref[layer], stack,
                       preferred_element_type=jnp.float32)   # (C+1, N)

    def prelu(v, a):
        return jnp.where(v >= 0.0, v, a * v)

    y1 = conv_stack(x, 0)                                # (C+1, N)
    f1 = prelu(y1[:c] + bconv_ref[0], aconv_ref[0])      # (C, N)
    s_pre = y1[c:]                                       # (1, N)  SA pre-act

    y2 = conv_stack(f1, 1)
    f2 = prelu(y2[:c] + bconv_ref[1], aconv_ref[1])

    y3 = conv_stack(f2, 2)
    f3 = prelu(y3[:c] + bconv_ref[2], aconv_ref[2])

    # 1x1 fuse conv over cat([f1, f2, f3], channel) + PReLU: single dot.
    fcat = jnp.concatenate([f1, f2, f3], axis=0)         # (3C, N)
    f = jnp.dot(wf_ref[...], fcat,
                preferred_element_type=jnp.float32) + bf_ref[...]
    f = prelu(f, af_ref[...])

    # Spatial attention: sigmoid of the folded-in 1x1 conv row.
    s = jax.nn.sigmoid(s_pre + bs_ref[...])              # (1, N)

    out_ref[...] = (f * s).astype(out_ref.dtype)


# --------------------------------------------------------------------------
# Host-side parameter / mask preparation and the pallas_call wrapper
# --------------------------------------------------------------------------
def _stack_conv_weight(w_oihw):
    # (C_out, C_in, 3, 3) -> (C_out, 9*C_in); column block t = ky*3+kx holds
    # the (C_out, C_in) weights of that tap.
    c_out, c_in = w_oihw.shape[0], w_oihw.shape[1]
    return jnp.transpose(w_oihw, (0, 2, 3, 1)).reshape(c_out, 9 * c_in)


def _border_masks(h, w, c, bt):
    # (9*C, Bt*H*W) masks: row t*C+i is the validity mask of tap t (channel-
    # independent), tiled Bt times along lanes so rolls never leak across
    # frame boundaries when frames are lane-concatenated.
    yy, xx = jnp.meshgrid(jnp.arange(h), jnp.arange(w), indexing="ij")
    taps = []
    for ky in range(3):
        for kx in range(3):
            dy, dx = ky - 1, kx - 1
            m = ((yy + dy >= 0) & (yy + dy < h) &
                 (xx + dx >= 0) & (xx + dx < w))
            taps.append(m.astype(jnp.float32).reshape(h * w))
    m = jnp.stack(taps)                                            # (9, HW)
    m = jnp.broadcast_to(m[:, None, :], (9, c, h * w)).reshape(9 * c, h * w)
    return jnp.tile(m, (1, bt))                                    # (9C, Bt*HW)


def mdsa_forward(x_nchw, params):
    b, c, h, w = x_nchw.shape
    hw = h * w

    # Grid sizing: fold frames onto the lane axis but keep min(B, 2) grid
    # steps so both v7x TensorCores get work ("parallel" megacore sharding).
    n_steps = 2 if b >= 2 else 1
    bt = -(-b // n_steps)                 # frames per grid step (ceil)
    b_pad = bt * n_steps
    nb = bt * hw                          # lane extent per grid step

    x_flat = x_nchw.reshape(b, c, hw)
    if b_pad != b:
        pad = jnp.zeros((b_pad - b, c, hw), x_flat.dtype)
        x_flat = jnp.concatenate([x_flat, pad], axis=0)
    # Lane-dense layout: (C, B_pad*HW), frames contiguous on the lane axis.
    x2d = jnp.transpose(x_flat, (1, 0, 2)).reshape(c, b_pad * hw)

    # Conv weights stacked to (C, 9C); layer 0 gets an extra row carrying the
    # spatial-attention 1x1 weight at the centre-tap (t=4) block.
    w1s = _stack_conv_weight(params["w1"])
    w2s = _stack_conv_weight(params["w2"])
    w3s = _stack_conv_weight(params["w3"])
    sa_row = jnp.zeros((1, 9 * c), jnp.float32)
    sa_row = sa_row.at[0, 4 * c:5 * c].set(params["ws"])
    zrow = jnp.zeros((1, 9 * c), jnp.float32)
    wconv = jnp.stack([jnp.concatenate([w1s, sa_row], axis=0),
                       jnp.concatenate([w2s, zrow], axis=0),
                       jnp.concatenate([w3s, zrow], axis=0)])   # (3, C+1, 9C)

    bconv = jnp.stack([params["b1"], params["b2"],
                       params["b3"]]).reshape(3, c, 1)
    aconv = jnp.stack([params["a1"], params["a2"],
                       params["a3"]]).reshape(3, c, 1)
    wf = params["wf"].reshape(c, 3 * c)
    bf = params["bf"].reshape(c, 1)
    af = params["af"].reshape(c, 1)
    bs = jnp.asarray(params["bs"], jnp.float32).reshape(1, 1)
    masks = _border_masks(h, w, c, bt)                          # (9C, Bt*HW)

    def const(shape):
        rank = len(shape)
        return pl.BlockSpec(shape, lambda i, _r=rank: (0,) * _r)

    out2d = pl.pallas_call(
        functools.partial(_mdsa_kernel, img_w=w),
        out_shape=jax.ShapeDtypeStruct((c, b_pad * hw), jnp.float32),
        grid_spec=pltpu.PrefetchScalarGridSpec(
            num_scalar_prefetch=0,
            grid=(n_steps,),
            in_specs=[
                pl.BlockSpec((c, nb), lambda i: (0, i)),        # x (lane-tiled)
                const((9 * c, nb)),                             # masks
                const((3, c + 1, 9 * c)),                       # conv (+SA) w
                const((3, c, 1)),                               # conv biases
                const((3, c, 1)),                               # PReLU slopes
                const((c, 3 * c)),                              # fuse weight
                const((c, 1)),                                  # fuse bias
                const((c, 1)),                                  # fuse PReLU
                const((1, 1)),                                  # sa bias
            ],
            out_specs=pl.BlockSpec((c, nb), lambda i: (0, i)),
        ),
        compiler_params=pltpu.CompilerParams(
            dimension_semantics=("parallel",),
            vmem_limit_bytes=32 * 1024 * 1024),
    )(x2d, masks, wconv, bconv, aconv, wf, bf, af, bs)

    out = jnp.transpose(out2d.reshape(c, b_pad, hw), (1, 0, 2))[:b]
    return out.reshape(b, c, h, w)


# --------------------------------------------------------------------------
# Pure-JAX reference (NCHW, matches the PyTorch module) for verification
# --------------------------------------------------------------------------
def mdsa_reference(x_nchw, params):
    c = x_nchw.shape[1]
    hi = lax.Precision.HIGHEST

    def conv3(inp, wgt, bias, alpha):
        y = lax.conv_general_dilated(
            inp, wgt, window_strides=(1, 1), padding="SAME",
            dimension_numbers=("NCHW", "OIHW", "NCHW"), precision=hi)
        y = y + bias.reshape(1, c, 1, 1)
        return jnp.where(y >= 0.0, y, alpha.reshape(1, c, 1, 1) * y)

    f1 = conv3(x_nchw, params["w1"], params["b1"], params["a1"])
    f2 = conv3(f1, params["w2"], params["b2"], params["a2"])
    f3 = conv3(f2, params["w3"], params["b3"], params["a3"])

    cat = jnp.concatenate([f1, f2, f3], axis=1)          # (B, 3C, H, W)
    f = jnp.einsum("bihw,oi->bohw", cat, params["wf"], precision=hi)
    f = f + params["bf"].reshape(1, c, 1, 1)
    f = jnp.where(f >= 0.0, f, params["af"].reshape(1, c, 1, 1) * f)

    s = jnp.einsum("bchw,c->bhw", x_nchw, params["ws"], precision=hi)
    s = jax.nn.sigmoid(s[:, None, :, :] + params["bs"])
    return f * s


def init_params(key, c):
    ks = jax.random.split(key, 9)
    scale = 0.1
    p = {}
    # 3x3 convs stored PyTorch-style: OIHW (C_out, C_in, 3, 3)
    for i, name in enumerate(("1", "2", "3")):
        p["w" + name] = scale * jax.random.normal(ks[i], (c, c, 3, 3),
                                                  jnp.float32)
        p["b" + name] = scale * jax.random.normal(ks[3 + i], (c,), jnp.float32)
        p["a" + name] = jnp.full((c,), 0.25, jnp.float32)   # PReLU default
    # conv_fuse: 1x1, (3C -> C), stored as (C_out, 3C_in)
    p["wf"] = scale * jax.random.normal(ks[6], (c, 3 * c), jnp.float32)
    p["bf"] = scale * jax.random.normal(ks[7], (c,), jnp.float32)
    p["af"] = jnp.full((c,), 0.25, jnp.float32)
    # sa: 1x1, (C -> 1)
    p["ws"] = scale * jax.random.normal(ks[8], (c,), jnp.float32)
    p["bs"] = jnp.float32(0.05)
    return p


if __name__ == "__main__":
    B, C, H, W = 2, 4, 16, 16
    key = jax.random.PRNGKey(0)
    kx, kp = jax.random.split(key)
    x = jax.random.normal(kx, (B, C, H, W), jnp.float32)   # NCHW, like PyTorch
    params = init_params(kp, C)

    out = jax.block_until_ready(mdsa_forward(x, params))
    ref = jax.block_until_ready(mdsa_reference(x, params))

    assert out.shape == (B, C, H, W)
    err = float(jnp.max(jnp.abs(out - ref)))
    assert err < 1e-3, f"Pallas result mismatch: max abs err {err}"
    print("KERNEL_OK")
</pallas_src>

<mosaic_0001>
module attributes {stable_mosaic.version = 11 : i64} {
  func.func @_mdsa_kernel(%arg0: i32, %arg1: memref<4x256xf32, #tpu.memory_space<vmem>>, %arg2: memref<36x256xf32, #tpu.memory_space<vmem>>, %arg3: memref<3x5x36xf32, #tpu.memory_space<vmem>>, %arg4: memref<3x4x1xf32, #tpu.memory_space<vmem>>, %arg5: memref<3x4x1xf32, #tpu.memory_space<vmem>>, %arg6: memref<4x12xf32, #tpu.memory_space<vmem>>, %arg7: memref<4x1xf32, #tpu.memory_space<vmem>>, %arg8: memref<4x1xf32, #tpu.memory_space<vmem>>, %arg9: memref<1x1xf32, #tpu.memory_space<vmem>>, %arg10: memref<4x256xf32, #tpu.memory_space<vmem>>) attributes {dimension_semantics = [#tpu.dimension_semantics<parallel>], iteration_bounds = array<i64: 2>, scalar_prefetch = 0 : i64, scratch_operands = 0 : i64, tpu.core_type = #tpu.core_type<tc>, window_params = [{transform_indices = @transform_0, window_bounds = array<i64: 4, 256>}, {pipeline_mode = #tpu.pipeline_mode<synchronous>, transform_indices = @transform_1, window_bounds = array<i64: 36, 256>}, {pipeline_mode = #tpu.pipeline_mode<synchronous>, transform_indices = @transform_2, window_bounds = array<i64: 3, 5, 36>}, {pipeline_mode = #tpu.pipeline_mode<synchronous>, transform_indices = @transform_3, window_bounds = array<i64: 3, 4, 1>}, {pipeline_mode = #tpu.pipeline_mode<synchronous>, transform_indices = @transform_4, window_bounds = array<i64: 3, 4, 1>}, {pipeline_mode = #tpu.pipeline_mode<synchronous>, transform_indices = @transform_5, window_bounds = array<i64: 4, 12>}, {pipeline_mode = #tpu.pipeline_mode<synchronous>, transform_indices = @transform_6, window_bounds = array<i64: 4, 1>}, {pipeline_mode = #tpu.pipeline_mode<synchronous>, transform_indices = @transform_7, window_bounds = array<i64: 4, 1>}, {pipeline_mode = #tpu.pipeline_mode<synchronous>, transform_indices = @transform_8, window_bounds = array<i64: 1, 1>}, {transform_indices = @transform_9, window_bounds = array<i64: 4, 256>}]} {
    %c0 = arith.constant 0 : index
    %c0_0 = arith.constant 0 : index
    %0 = vector.load %arg1[%c0, %c0_0] : memref<4x256xf32, #tpu.memory_space<vmem>>, vector<4x256xf32>
    %c0_1 = arith.constant 0 : index
    %c0_2 = arith.constant 0 : index
    %1 = vector.load %arg2[%c0_1, %c0_2] : memref<36x256xf32, #tpu.memory_space<vmem>>, vector<36x256xf32>
    %c17_i32 = arith.constant 17 : i32
    %2 = tpu.dynamic_rotate %0 by %c17_i32 dim 1 : vector<4x256xf32>, i32 -> vector<4x256xf32>
    %c16_i32 = arith.constant 16 : i32
    %3 = tpu.dynamic_rotate %0 by %c16_i32 dim 1 : vector<4x256xf32>, i32 -> vector<4x256xf32>
    %c15_i32 = arith.constant 15 : i32
    %4 = tpu.dynamic_rotate %0 by %c15_i32 dim 1 : vector<4x256xf32>, i32 -> vector<4x256xf32>
    %c1_i32 = arith.constant 1 : i32
    %5 = tpu.dynamic_rotate %0 by %c1_i32 dim 1 : vector<4x256xf32>, i32 -> vector<4x256xf32>
    %c255_i32 = arith.constant 255 : i32
    %6 = tpu.dynamic_rotate %0 by %c255_i32 dim 1 : vector<4x256xf32>, i32 -> vector<4x256xf32>
    %c241_i32 = arith.constant 241 : i32
    %7 = tpu.dynamic_rotate %0 by %c241_i32 dim 1 : vector<4x256xf32>, i32 -> vector<4x256xf32>
    %c240_i32 = arith.constant 240 : i32
    %8 = tpu.dynamic_rotate %0 by %c240_i32 dim 1 : vector<4x256xf32>, i32 -> vector<4x256xf32>
    %c239_i32 = arith.constant 239 : i32
    %9 = tpu.dynamic_rotate %0 by %c239_i32 dim 1 : vector<4x256xf32>, i32 -> vector<4x256xf32>
    %10 = tpu.concatenate %2, %3, %4, %5, %0, %6, %7, %8, %9 in 0 : vector<4x256xf32>, vector<4x256xf32>, vector<4x256xf32>, vector<4x256xf32>, vector<4x256xf32>, vector<4x256xf32>, vector<4x256xf32>, vector<4x256xf32>, vector<4x256xf32> -> vector<36x256xf32>
    %11 = arith.mulf %10, %1 : vector<36x256xf32>
    %c0_3 = arith.constant 0 : index
    %c0_4 = arith.constant 0 : index
    %c0_5 = arith.constant 0 : index
    %12 = vector.load %arg3[%c0_3, %c0_4, %c0_5] : memref<3x5x36xf32, #tpu.memory_space<vmem>>, vector<1x5x36xf32>
    %13 = vector.shape_cast %12 : vector<1x5x36xf32> to vector<5x36xf32>
    %cst = arith.constant dense<0.000000e+00> : vector<5x256xf32>
    %14 = tpu.matmul %13, %11, %cst {dimension_numbers = #tpu.dot_dimension_numbers<[1], [0], [0], [1], [0, 0, 1, 1], [], []>} : vector<5x36xf32>, vector<36x256xf32>, vector<5x256xf32> -> vector<5x256xf32>
    %15 = vector.extract_strided_slice %14 {offsets = [0, 0], sizes = [4, 256], strides = [1, 1]} : vector<5x256xf32> to vector<4x256xf32>
    %c0_6 = arith.constant 0 : index
    %c0_7 = arith.constant 0 : index
    %c0_8 = arith.constant 0 : index
    %16 = vector.load %arg4[%c0_6, %c0_7, %c0_8] : memref<3x4x1xf32, #tpu.memory_space<vmem>>, vector<1x4x1xf32>
    %17 = vector.shape_cast %16 : vector<1x4x1xf32> to vector<4x1xf32>
    %18 = vector.broadcast %17 : vector<4x1xf32> to vector<4x256xf32>
    %19 = arith.addf %15, %18 : vector<4x256xf32>
    %c0_9 = arith.constant 0 : index
    %c0_10 = arith.constant 0 : index
    %c0_11 = arith.constant 0 : index
    %20 = vector.load %arg5[%c0_9, %c0_10, %c0_11] : memref<3x4x1xf32, #tpu.memory_space<vmem>>, vector<1x4x1xf32>
    %21 = vector.shape_cast %20 : vector<1x4x1xf32> to vector<4x1xf32>
    %cst_12 = arith.constant 0.000000e+00 : f32
    %22 = vector.broadcast %cst_12 : f32 to vector<4x256xf32>
    %23 = arith.cmpf oge, %19, %22 : vector<4x256xf32>
    %24 = vector.broadcast %21 : vector<4x1xf32> to vector<4x256xf32>
    %25 = arith.mulf %24, %19 : vector<4x256xf32>
    %26 = arith.select %23, %19, %25 : vector<4x256xi1>, vector<4x256xf32>
    %27 = vector.extract_strided_slice %14 {offsets = [4, 0], sizes = [1, 256], strides = [1, 1]} : vector<5x256xf32> to vector<1x256xf32>
    %c17_i32_13 = arith.constant 17 : i32
    %28 = tpu.dynamic_rotate %26 by %c17_i32_13 dim 1 : vector<4x256xf32>, i32 -> vector<4x256xf32>
    %c16_i32_14 = arith.constant 16 : i32
    %29 = tpu.dynamic_rotate %26 by %c16_i32_14 dim 1 : vector<4x256xf32>, i32 -> vector<4x256xf32>
    %c15_i32_15 = arith.constant 15 : i32
    %30 = tpu.dynamic_rotate %26 by %c15_i32_15 dim 1 : vector<4x256xf32>, i32 -> vector<4x256xf32>
    %c1_i32_16 = arith.constant 1 : i32
    %31 = tpu.dynamic_rotate %26 by %c1_i32_16 dim 1 : vector<4x256xf32>, i32 -> vector<4x256xf32>
    %c255_i32_17 = arith.constant 255 : i32
    %32 = tpu.dynamic_rotate %26 by %c255_i32_17 dim 1 : vector<4x256xf32>, i32 -> vector<4x256xf32>
    %c241_i32_18 = arith.constant 241 : i32
    %33 = tpu.dynamic_rotate %26 by %c241_i32_18 dim 1 : vector<4x256xf32>, i32 -> vector<4x256xf32>
    %c240_i32_19 = arith.constant 240 : i32
    %34 = tpu.dynamic_rotate %26 by %c240_i32_19 dim 1 : vector<4x256xf32>, i32 -> vector<4x256xf32>
    %c239_i32_20 = arith.constant 239 : i32
    %35 = tpu.dynamic_rotate %26 by %c239_i32_20 dim 1 : vector<4x256xf32>, i32 -> vector<4x256xf32>
    %36 = tpu.concatenate %28, %29, %30, %31, %26, %32, %33, %34, %35 in 0 : vector<4x256xf32>, vector<4x256xf32>, vector<4x256xf32>, vector<4x256xf32>, vector<4x256xf32>, vector<4x256xf32>, vector<4x256xf32>, vector<4x256xf32>, vector<4x256xf32> -> vector<36x256xf32>
    %37 = arith.mulf %36, %1 : vector<36x256xf32>
    %c1 = arith.constant 1 : index
    %c0_21 = arith.constant 0 : index
    %c0_22 = arith.constant 0 : index
    %38 = vector.load %arg3[%c1, %c0_21, %c0_22] : memref<3x5x36xf32, #tpu.memory_space<vmem>>, vector<1x5x36xf32>
    %39 = vector.shape_cast %38 : vector<1x5x36xf32> to vector<5x36xf32>
    %cst_23 = arith.constant dense<0.000000e+00> : vector<5x256xf32>
    %40 = tpu.matmul %39, %37, %cst_23 {dimension_numbers = #tpu.dot_dimension_numbers<[1], [0], [0], [1], [0, 0, 1, 1], [], []>} : vector<5x36xf32>, vector<36x256xf32>, vector<5x256xf32> -> vector<5x256xf32>
    %41 = vector.extract_strided_slice %40 {offsets = [0, 0], sizes = [4, 256], strides = [1, 1]} : vector<5x256xf32> to vector<4x256xf32>
    %c1_24 = arith.constant 1 : index
    %c0_25 = arith.constant 0 : index
    %c0_26 = arith.constant 0 : index
    %42 = vector.load %arg4[%c1_24, %c0_25, %c0_26] : memref<3x4x1xf32, #tpu.memory_space<vmem>>, vector<1x4x1xf32>
    %43 = vector.shape_cast %42 : vector<1x4x1xf32> to vector<4x1xf32>
    %44 = vector.broadcast %43 : vector<4x1xf32> to vector<4x256xf32>
    %45 = arith.addf %41, %44 : vector<4x256xf32>
    %c1_27 = arith.constant 1 : index
    %c0_28 = arith.constant 0 : index
    %c0_29 = arith.constant 0 : index
    %46 = vector.load %arg5[%c1_27, %c0_28, %c0_29] : memref<3x4x1xf32, #tpu.memory_space<vmem>>, vector<1x4x1xf32>
    %47 = vector.shape_cast %46 : vector<1x4x1xf32> to vector<4x1xf32>
    %cst_30 = arith.constant 0.000000e+00 : f32
    %48 = vector.broadcast %cst_30 : f32 to vector<4x256xf32>
    %49 = arith.cmpf oge, %45, %48 : vector<4x256xf32>
    %50 = vector.broadcast %47 : vector<4x1xf32> to vector<4x256xf32>
    %51 = arith.mulf %50, %45 : vector<4x256xf32>
    %52 = arith.select %49, %45, %51 : vector<4x256xi1>, vector<4x256xf32>
    %c17_i32_31 = arith.constant 17 : i32
    %53 = tpu.dynamic_rotate %52 by %c17_i32_31 dim 1 : vector<4x256xf32>, i32 -> vector<4x256xf32>
    %c16_i32_32 = arith.constant 16 : i32
    %54 = tpu.dynamic_rotate %52 by %c16_i32_32 dim 1 : vector<4x256xf32>, i32 -> vector<4x256xf32>
    %c15_i32_33 = arith.constant 15 : i32
    %55 = tpu.dynamic_rotate %52 by %c15_i32_33 dim 1 : vector<4x256xf32>, i32 -> vector<4x256xf32>
    %c1_i32_34 = arith.constant 1 : i32
    %56 = tpu.dynamic_rotate %52 by %c1_i32_34 dim 1 : vector<4x256xf32>, i32 -> vector<4x256xf32>
    %c255_i32_35 = arith.constant 255 : i32
    %57 = tpu.dynamic_rotate %52 by %c255_i32_35 dim 1 : vector<4x256xf32>, i32 -> vector<4x256xf32>
    %c241_i32_36 = arith.constant 241 : i32
    %58 = tpu.dynamic_rotate %52 by %c241_i32_36 dim 1 : vector<4x256xf32>, i32 -> vector<4x256xf32>
    %c240_i32_37 = arith.constant 240 : i32
    %59 = tpu.dynamic_rotate %52 by %c240_i32_37 dim 1 : vector<4x256xf32>, i32 -> vector<4x256xf32>
    %c239_i32_38 = arith.constant 239 : i32
    %60 = tpu.dynamic_rotate %52 by %c239_i32_38 dim 1 : vector<4x256xf32>, i32 -> vector<4x256xf32>
    %61 = tpu.concatenate %53, %54, %55, %56, %52, %57, %58, %59, %60 in 0 : vector<4x256xf32>, vector<4x256xf32>, vector<4x256xf32>, vector<4x256xf32>, vector<4x256xf32>, vector<4x256xf32>, vector<4x256xf32>, vector<4x256xf32>, vector<4x256xf32> -> vector<36x256xf32>
    %62 = arith.mulf %61, %1 : vector<36x256xf32>
    %c2 = arith.constant 2 : index
    %c0_39 = arith.constant 0 : index
    %c0_40 = arith.constant 0 : index
    %63 = vector.load %arg3[%c2, %c0_39, %c0_40] : memref<3x5x36xf32, #tpu.memory_space<vmem>>, vector<1x5x36xf32>
    %64 = vector.shape_cast %63 : vector<1x5x36xf32> to vector<5x36xf32>
    %cst_41 = arith.constant dense<0.000000e+00> : vector<5x256xf32>
    %65 = tpu.matmul %64, %62, %cst_41 {dimension_numbers = #tpu.dot_dimension_numbers<[1], [0], [0], [1], [0, 0, 1, 1], [], []>} : vector<5x36xf32>, vector<36x256xf32>, vector<5x256xf32> -> vector<5x256xf32>
    %66 = vector.extract_strided_slice %65 {offsets = [0, 0], sizes = [4, 256], strides = [1, 1]} : vector<5x256xf32> to vector<4x256xf32>
    %c2_42 = arith.constant 2 : index
    %c0_43 = arith.constant 0 : index
    %c0_44 = arith.constant 0 : index
    %67 = vector.load %arg4[%c2_42, %c0_43, %c0_44] : memref<3x4x1xf32, #tpu.memory_space<vmem>>, vector<1x4x1xf32>
    %68 = vector.shape_cast %67 : vector<1x4x1xf32> to vector<4x1xf32>
    %69 = vector.broadcast %68 : vector<4x1xf32> to vector<4x256xf32>
    %70 = arith.addf %66, %69 : vector<4x256xf32>
    %c2_45 = arith.constant 2 : index
    %c0_46 = arith.constant 0 : index
    %c0_47 = arith.constant 0 : index
    %71 = vector.load %arg5[%c2_45, %c0_46, %c0_47] : memref<3x4x1xf32, #tpu.memory_space<vmem>>, vector<1x4x1xf32>
    %72 = vector.shape_cast %71 : vector<1x4x1xf32> to vector<4x1xf32>
    %cst_48 = arith.constant 0.000000e+00 : f32
    %73 = vector.broadcast %cst_48 : f32 to vector<4x256xf32>
    %74 = arith.cmpf oge, %70, %73 : vector<4x256xf32>
    %75 = vector.broadcast %72 : vector<4x1xf32> to vector<4x256xf32>
    %76 = arith.mulf %75, %70 : vector<4x256xf32>
    %77 = arith.select %74, %70, %76 : vector<4x256xi1>, vector<4x256xf32>
    %78 = tpu.concatenate %26, %52, %77 in 0 : vector<4x256xf32>, vector<4x256xf32>, vector<4x256xf32> -> vector<12x256xf32>
    %c0_49 = arith.constant 0 : index
    %c0_50 = arith.constant 0 : index
    %79 = vector.load %arg6[%c0_49, %c0_50] : memref<4x12xf32, #tpu.memory_space<vmem>>, vector<4x12xf32>
    %cst_51 = arith.constant dense<0.000000e+00> : vector<4x256xf32>
    %80 = tpu.matmul %79, %78, %cst_51 {dimension_numbers = #tpu.dot_dimension_numbers<[1], [0], [0], [1], [0, 0, 1, 1], [], []>} : vector<4x12xf32>, vector<12x256xf32>, vector<4x256xf32> -> vector<4x256xf32>
    %c0_52 = arith.constant 0 : index
    %c0_53 = arith.constant 0 : index
    %81 = vector.load %arg7[%c0_52, %c0_53] : memref<4x1xf32, #tpu.memory_space<vmem>>, vector<4x1xf32>
    %82 = vector.broadcast %81 : vector<4x1xf32> to vector<4x256xf32>
    %83 = arith.addf %80, %82 : vector<4x256xf32>
    %c0_54 = arith.constant 0 : index
    %c0_55 = arith.constant 0 : index
    %84 = vector.load %arg8[%c0_54, %c0_55] : memref<4x1xf32, #tpu.memory_space<vmem>>, vector<4x1xf32>
    %cst_56 = arith.constant 0.000000e+00 : f32
    %85 = vector.broadcast %cst_56 : f32 to vector<4x256xf32>
    %86 = arith.cmpf oge, %83, %85 : vector<4x256xf32>
    %87 = vector.broadcast %84 : vector<4x1xf32> to vector<4x256xf32>
    %88 = arith.mulf %87, %83 : vector<4x256xf32>
    %89 = arith.select %86, %83, %88 : vector<4x256xi1>, vector<4x256xf32>
    %c0_57 = arith.constant 0 : index
    %c0_58 = arith.constant 0 : index
    %90 = vector.load %arg9[%c0_57, %c0_58] : memref<1x1xf32, #tpu.memory_space<vmem>>, vector<1x1xf32>
    %91 = vector.broadcast %90 : vector<1x1xf32> to vector<1x256xf32>
    %92 = arith.addf %27, %91 : vector<1x256xf32>
    %93 = arith.negf %92 : vector<1x256xf32>
    %94 = math.exp %93 : vector<1x256xf32>
    %cst_59 = arith.constant 1.000000e+00 : f32
    %95 = vector.broadcast %cst_59 : f32 to vector<1x256xf32>
    %96 = arith.addf %95, %94 : vector<1x256xf32>
    %97 = arith.divf %95, %96 : vector<1x256xf32>
    %98 = vector.broadcast %97 : vector<1x256xf32> to vector<4x256xf32>
    %99 = arith.mulf %89, %98 : vector<4x256xf32>
    %c0_60 = arith.constant 0 : index
    %c0_61 = arith.constant 0 : index
    %100 = vector.load %arg10[%c0_60, %c0_61] : memref<4x256xf32, #tpu.memory_space<vmem>>, vector<4x256xf32>
    tpu.vector_store %arg10[%c0_60, %c0_61], %99 {strides = array<i32>} : memref<4x256xf32, #tpu.memory_space<vmem>>, vector<4x256xf32>,
    return
  }
  func.func @transform_0(%arg0: i32) -> (i32, i32) {
    %c0_i32 = arith.constant 0 : i32
    %c0_i32_0 = arith.constant 0 : i32
    return %c0_i32, %arg0 : i32, i32
  }
  func.func @transform_1(%arg0: i32) -> (i32, i32) {
    %c0_i32 = arith.constant 0 : i32
    %c0_i32_0 = arith.constant 0 : i32
    %c0_i32_1 = arith.constant 0 : i32
    return %c0_i32, %c0_i32_0 : i32, i32
  }
  func.func @transform_2(%arg0: i32) -> (i32, i32, i32) {
    %c0_i32 = arith.constant 0 : i32
    %c0_i32_0 = arith.constant 0 : i32
    %c0_i32_1 = arith.constant 0 : i32
    %c0_i32_2 = arith.constant 0 : i32
    return %c0_i32, %c0_i32_0, %c0_i32_1 : i32, i32, i32
  }
  func.func @transform_3(%arg0: i32) -> (i32, i32, i32) {
    %c0_i32 = arith.constant 0 : i32
    %c0_i32_0 = arith.constant 0 : i32
    %c0_i32_1 = arith.constant 0 : i32
    %c0_i32_2 = arith.constant 0 : i32
    return %c0_i32, %c0_i32_0, %c0_i32_1 : i32, i32, i32
  }
  func.func @transform_4(%arg0: i32) -> (i32, i32, i32) {
    %c0_i32 = arith.constant 0 : i32
    %c0_i32_0 = arith.constant 0 : i32
    %c0_i32_1 = arith.constant 0 : i32
    %c0_i32_2 = arith.constant 0 : i32
    return %c0_i32, %c0_i32_0, %c0_i32_1 : i32, i32, i32
  }
  func.func @transform_5(%arg0: i32) -> (i32, i32) {
    %c0_i32 = arith.constant 0 : i32
    %c0_i32_0 = arith.constant 0 : i32
    %c0_i32_1 = arith.constant 0 : i32
    return %c0_i32, %c0_i32_0 : i32, i32
  }
  func.func @transform_6(%arg0: i32) -> (i32, i32) {
    %c0_i32 = arith.constant 0 : i32
    %c0_i32_0 = arith.constant 0 : i32
    %c0_i32_1 = arith.constant 0 : i32
    return %c0_i32, %c0_i32_0 : i32, i32
  }
  func.func @transform_7(%arg0: i32) -> (i32, i32) {
    %c0_i32 = arith.constant 0 : i32
    %c0_i32_0 = arith.constant 0 : i32
    %c0_i32_1 = arith.constant 0 : i32
    return %c0_i32, %c0_i32_0 : i32, i32
  }
  func.func @transform_8(%arg0: i32) -> (i32, i32) {
    %c0_i32 = arith.constant 0 : i32
    %c0_i32_0 = arith.constant 0 : i32
    %c0_i32_1 = arith.constant 0 : i32
    return %c0_i32, %c0_i32_0 : i32, i32
  }
  func.func @transform_9(%arg0: i32) -> (i32, i32) {
    %c0_i32 = arith.constant 0 : i32
    %c0_i32_0 = arith.constant 0 : i32
    return %c0_i32, %arg0 : i32, i32
  }
}

</mosaic_0001>

<llo_original>
// kernel: tpu_custom_call.1
$region0: #{tpu_custom_call.1}
  #allocation0 [shape = 'u32[]', space=smem, size = 0x4, offset = 0x4, fixed_abs, tag = 'smem constant byte address 0x4 - core index']
  #allocation1 [shape = 'u32[144,128]{1,0:T(1,128)}', space=vmem, size = 0x12000, scoped, tag = 'internal scratch']
  #allocation2 [shape = 'f32[1,1]{1,0:T(1,128)S(1)}', space=vmem, size = 0x200, scoped, tag = 'scoped memory for tpu_custom_call.1']
  %s0 = inlined_call_operand.hbm [shape: f32[4,512], index: 0, kind: input, shape index: {}]
  %s1 = inlined_call_operand.vmem [shape: f32[36,256], index: 1, kind: input, shape index: {}]
  %s2 = inlined_call_operand.vmem [shape: f32[3,5,36], index: 2, kind: input, shape index: {}]
  %s3 = inlined_call_operand.vmem [shape: f32[3,4,1], index: 3, kind: input, shape index: {}]
  %s4 = inlined_call_operand.vmem [shape: f32[3,4,1], index: 4, kind: input, shape index: {}]
  %s5 = inlined_call_operand.vmem [shape: f32[4,12], index: 5, kind: input, shape index: {}]
  %s6 = inlined_call_operand.vmem [shape: f32[4,1], index: 6, kind: input, shape index: {}]
  %s7 = inlined_call_operand.vmem [shape: f32[4,1], index: 7, kind: input, shape index: {}]
  %s8 = inlined_call_operand.<no memory space> [shape: f32[1,1], index: 8, kind: input, shape index: {}]
  %s9 = inlined_call_operand.hbm [shape: f32[4,512], index: 9, kind: output, shape index: {}]
  %s10 = sld [smem:[#allocation0]]
  $region73: #{tpu_custom_call.1} parent=0
    _
  %s12 = ssub.s32 1, %s10
  %s13 = scalar_select 0, %s12, %s10
  %v14 = vstv %s8
  %15 = vst [vmem:[#allocation2] sm:$0x1] %v14
  $region1: #{tpu_custom_call.1} parent=0
    #allocation3 [shape = 'u8[8192]{0}', space=vmem, size = 0x2000, scoped, tag = 'input window, operand 0']
    #allocation4 [shape = 's32[2]{0}', space=sflag, size = 0x8, scoped, tag = 'scoped memory for tpu_custom_call.1']
    #allocation5 [shape = 's32[2]{0}', space=sflag, size = 0x8, scoped, tag = 'scoped memory for tpu_custom_call.1']
    #allocation6 [shape = 'u8[8192]{0}', space=vmem, size = 0x2000, scoped, tag = 'output window, operand 0']
    %16 = vsyncpa [#allocation4], 0
    %s17 = scalar_lea.sflag [#allocation4], 1
    %18 = vsyncpa %s17, 0
    %19 = vsyncpa [#allocation5], 0
    %s20 = scalar_lea.sflag [#allocation5], 1
    %21 = vsyncpa %s20, 0
    loop: start=0, step=1, limit=4
    $region2: #{tpu_custom_call.1} parent=1 // loop_pre_header
      _
    $region3: #{tpu_custom_call.1} parent=1 // loop_header
      %s23 = sphi 0, %s27
      %p24 = scmp.ge.s32.totalorder %s23, 4
      %s33 = sphi 0, %s35
      %s36 = sphi 0, %s33
      %s37 = sphi 0, %s36
      %s53 = sphi 0, %s37
      %s57 = sphi 0, %s57
      %s59 = sphi 0, %s57
      %s60 = sphi 0, %s59
      %s74 = sphi 0, %s60
      %s78 = sphi 0, %s78
      %s80 = sphi 0, %s78
      %s81 = sphi 0, %s80
      %s95 = sphi 0, %s81
      %s99 = sphi 0, %s99
      %s101 = sphi 0, %s99
      %s102 = sphi 0, %s101
      %s116 = sphi 0, %s102
      %s120 = sphi 0, %s120
      %s122 = sphi 0, %s120
      %s123 = sphi 0, %s122
      %s137 = sphi 0, %s123
      %s141 = sphi 0, %s141
      %s143 = sphi 0, %s141
      %s144 = sphi 0, %s143
      %s158 = sphi 0, %s144
      %s162 = sphi 0, %s162
      %s164 = sphi 0, %s162
      %s165 = sphi 0, %s164
      %s179 = sphi 0, %s165
      %s183 = sphi 0, %s183
      %s185 = sphi 0, %s183
      %s186 = sphi 0, %s185
      %s200 = sphi 0, %s186
      %s204 = sphi 0, %s204
      %s206 = sphi 0, %s204
      %s207 = sphi 0, %s206
      %s221 = sphi 0, %s207
      %s227 = sphi 0, %s229
      %s230 = sphi 0, %s227
      %s231 = sphi 0, %s230
      %s247 = sphi 0, %s231
    $region4: #{tpu_custom_call.1} parent=1 // loop_header_branch
      %26 = sbr.rel (%p24) target = $region8
    $region5: #{tpu_custom_call.1} parent=1 // loop_body
      %s28 = ssub.s32 %s23, 1
      %s29 = ssub.s32 %s23, 2
      %s30 = sadd.s32 %s23, 1
      %s31 = ssub.s32 %s23, %s30
      %p32 = scmp.eq.s32.totalorder %s31, 0
      %s34 = sadd.s32 %s33, 1
      %s35 = scalar_select %p32, %s33, %s34
      %p38 = pneg %p32
      %p39 = scmp.eq.s32.totalorder %s23, 1
      %p40 = por %p38, %p39
      %p41 = scmp.ne.s32.totalorder %s33, %s36
      %p42 = scmp.eq.s32.totalorder %s23, 0
      %p43 = por %p41, %p42
      %p44 = scmp.ne.s32.totalorder %s33, %s36
      %p45 = scmp.eq.s32.totalorder %s28, 1
      %p46 = por %p44, %p45
      %p47 = scmp.ne.s32.totalorder %s36, %s37
      %p48 = scmp.eq.s32.totalorder %s28, 0
      %p49 = por %p47, %p48
      %p50 = scmp.ne.s32.totalorder %s36, %s37
      %p51 = scmp.eq.s32.totalorder %s29, 1
      %p52 = por %p50, %p51
      %p54 = scmp.ne.s32.totalorder %s37, %s53
      %p55 = scmp.eq.s32.totalorder %s29, 0
      %p56 = por %p54, %p55
      %s58 = sadd.s32 %s57, 1
      %p61 = scmp.eq.s32.totalorder %s23, 1
      %p62 = scmp.ne.s32.totalorder %s57, %s59
      %p63 = scmp.eq.s32.totalorder %s23, 0
      %p64 = por %p62, %p63
      %p65 = scmp.ne.s32.totalorder %s57, %s59
      %p66 = scmp.eq.s32.totalorder %s28, 1
      %p67 = por %p65, %p66
      %p68 = scmp.ne.s32.totalorder %s59, %s60
      %p69 = scmp.eq.s32.totalorder %s28, 0
      %p70 = por %p68, %p69
      %p71 = scmp.ne.s32.totalorder %s59, %s60
      %p72 = scmp.eq.s32.totalorder %s29, 1
      %p73 = por %p71, %p72
      %p75 = scmp.ne.s32.totalorder %s60, %s74
      %p76 = scmp.eq.s32.totalorder %s29, 0
      %p77 = por %p75, %p76
      %s79 = sadd.s32 %s78, 1
      %p82 = scmp.eq.s32.totalorder %s23, 1
      %p83 = scmp.ne.s32.totalorder %s78, %s80
      %p84 = scmp.eq.s32.totalorder %s23, 0
      %p85 = por %p83, %p84
      %p86 = scmp.ne.s32.totalorder %s78, %s80
      %p87 = scmp.eq.s32.totalorder %s28, 1
      %p88 = por %p86, %p87
      %p89 = scmp.ne.s32.totalorder %s80, %s81
      %p90 = scmp.eq.s32.totalorder %s28, 0
      %p91 = por %p89, %p90
      %p92 = scmp.ne.s32.totalorder %s80, %s81
      %p93 = scmp.eq.s32.totalorder %s29, 1
      %p94 = por %p92, %p93
      %p96 = scmp.ne.s32.totalorder %s81, %s95
      %p97 = scmp.eq.s32.totalorder %s29, 0
      %p98 = por %p96, %p97
      %s100 = sadd.s32 %s99, 1
      %p103 = scmp.eq.s32.totalorder %s23, 1
      %p104 = scmp.ne.s32.totalorder %s99, %s101
      %p105 = scmp.eq.s32.totalorder %s23, 0
      %p106 = por %p104, %p105
      %p107 = scmp.ne.s32.totalorder %s99, %s101
      %p108 = scmp.eq.s32.totalorder %s28, 1
      %p109 = por %p107, %p108
      %p110 = scmp.ne.s32.totalorder %s101, %s102
      %p111 = scmp.eq.s32.totalorder %s28, 0
      %p112 = por %p110, %p111
      %p113 = scmp.ne.s32.totalorder %s101, %s102
      %p114 = scmp.eq.s32.totalorder %s29, 1
      %p115 = por %p113, %p114
      %p117 = scmp.ne.s32.totalorder %s102, %s116
      %p118 = scmp.eq.s32.totalorder %s29, 0
      %p119 = por %p117, %p118
      %s121 = sadd.s32 %s120, 1
      %p124 = scmp.eq.s32.totalorder %s23, 1
      %p125 = scmp.ne.s32.totalorder %s120, %s122
      %p126 = scmp.eq.s32.totalorder %s23, 0
      %p127 = por %p125, %p126
      %p128 = scmp.ne.s32.totalorder %s120, %s122
      %p129 = scmp.eq.s32.totalorder %s28, 1
      %p130 = por %p128, %p129
      %p131 = scmp.ne.s32.totalorder %s122, %s123
      %p132 = scmp.eq.s32.totalorder %s28, 0
      %p133 = por %p131, %p132
      %p134 = scmp.ne.s32.totalorder %s122, %s123
      %p135 = scmp.eq.s32.totalorder %s29, 1
      %p136 = por %p134, %p135
      %p138 = scmp.ne.s32.totalorder %s123, %s137
      %p139 = scmp.eq.s32.totalorder %s29, 0
      %p140 = por %p138, %p139
      %s142 = sadd.s32 %s141, 1
      %p145 = scmp.eq.s32.totalorder %s23, 1
      %p146 = scmp.ne.s32.totalorder %s141, %s143
      %p147 = scmp.eq.s32.totalorder %s23, 0
      %p148 = por %p146, %p147
      %p149 = scmp.ne.s32.totalorder %s141, %s143
      %p150 = scmp.eq.s32.totalorder %s28, 1
      %p151 = por %p149, %p150
      %p152 = scmp.ne.s32.totalorder %s143, %s144
      %p153 = scmp.eq.s32.totalorder %s28, 0
      %p154 = por %p152, %p153
      %p155 = scmp.ne.s32.totalorder %s143, %s144
      %p156 = scmp.eq.s32.totalorder %s29, 1
      %p157 = por %p155, %p156
      %p159 = scmp.ne.s32.totalorder %s144, %s158
      %p160 = scmp.eq.s32.totalorder %s29, 0
      %p161 = por %p159, %p160
      %s163 = sadd.s32 %s162, 1
      %p166 = scmp.eq.s32.totalorder %s23, 1
      %p167 = scmp.ne.s32.totalorder %s162, %s164
      %p168 = scmp.eq.s32.totalorder %s23, 0
      %p169 = por %p167, %p168
      %p170 = scmp.ne.s32.totalorder %s162, %s164
      %p171 = scmp.eq.s32.totalorder %s28, 1
      %p172 = por %p170, %p171
      %p173 = scmp.ne.s32.totalorder %s164, %s165
      %p174 = scmp.eq.s32.totalorder %s28, 0
      %p175 = por %p173, %p174
      %p176 = scmp.ne.s32.totalorder %s164, %s165
      %p177 = scmp.eq.s32.totalorder %s29, 1
      %p178 = por %p176, %p177
      %p180 = scmp.ne.s32.totalorder %s165, %s179
      %p181 = scmp.eq.s32.totalorder %s29, 0
      %p182 = por %p180, %p181
      %s184 = sadd.s32 %s183, 1
      %p187 = scmp.eq.s32.totalorder %s23, 1
      %p188 = scmp.ne.s32.totalorder %s183, %s185
      %p189 = scmp.eq.s32.totalorder %s23, 0
      %p190 = por %p188, %p189
      %p191 = scmp.ne.s32.totalorder %s183, %s185
      %p192 = scmp.eq.s32.totalorder %s28, 1
      %p193 = por %p191, %p192
      %p194 = scmp.ne.s32.totalorder %s185, %s186
      %p195 = scmp.eq.s32.totalorder %s28, 0
      %p196 = por %p194, %p195
      %p197 = scmp.ne.s32.totalorder %s185, %s186
      %p198 = scmp.eq.s32.totalorder %s29, 1
      %p199 = por %p197, %p198
      %p201 = scmp.ne.s32.totalorder %s186, %s200
      %p202 = scmp.eq.s32.totalorder %s29, 0
      %p203 = por %p201, %p202
      %s205 = sadd.s32 %s204, 1
      %p208 = scmp.eq.s32.totalorder %s23, 1
      %p209 = scmp.ne.s32.totalorder %s204, %s206
      %p210 = scmp.eq.s32.totalorder %s23, 0
      %p211 = por %p209, %p210
      %p212 = scmp.ne.s32.totalorder %s204, %s206
      %p213 = scmp.eq.s32.totalorder %s28, 1
      %p214 = por %p212, %p213
      %p215 = scmp.ne.s32.totalorder %s206, %s207
      %p216 = scmp.eq.s32.totalorder %s28, 0
      %p217 = por %p215, %p216
      %p218 = scmp.ne.s32.totalorder %s206, %s207
      %p219 = scmp.eq.s32.totalorder %s29, 1
      %p220 = por %p218, %p219
      %p222 = scmp.ne.s32.totalorder %s207, %s221
      %p223 = scmp.eq.s32.totalorder %s29, 0
      %p224 = por %p222, %p223
      %s225 = ssub.s32 %s23, %s30
      %p226 = scmp.eq.s32.totalorder %s225, 0
      %s228 = sadd.s32 %s227, 1
      %s229 = scalar_select %p226, %s227, %s228
      %p232 = pneg %p226
      %p233 = scmp.eq.s32.totalorder %s23, 1
      %p234 = por %p232, %p233
      %p235 = scmp.ne.s32.totalorder %s227, %s230
      %p236 = scmp.eq.s32.totalorder %s23, 0
      %p237 = por %p235, %p236
      %p238 = scmp.ne.s32.totalorder %s227, %s230
      %p239 = scmp.eq.s32.totalorder %s28, 1
      %p240 = por %p238, %p239
      %p241 = scmp.ne.s32.totalorder %s230, %s231
      %p242 = scmp.eq.s32.totalorder %s28, 0
      %p243 = por %p241, %p242
      %p244 = scmp.ne.s32.totalorder %s230, %s231
      %p245 = scmp.eq.s32.totalorder %s29, 1
      %p246 = por %p244, %p245
      %p248 = scmp.ne.s32.totalorder %s231, %s247
      %p249 = scmp.eq.s32.totalorder %s29, 0
      %p250 = por %p248, %p249
      %p251 = scmp.le.s32.totalorder 1, %s23
      %p252 = scmp.lt.s32.totalorder %s23, 3
      %p253 = pnand %p251, %p252
      %p254 = pneg %p253
      // Predicated region
      $region9: #{tpu_custom_call.1} parent=5 // pred_check
        _
      $region10: #{tpu_custom_call.1} parent=5 // pred_check_branch
        %256 = sbr.rel (%p253) target = $region12
      $region11: #{tpu_custom_call.1} parent=5 // pred_region
        %s257 = ssub.s32 %s23, 1
        // Predicated region
        $region13: #{tpu_custom_call.1} parent=11 // pred_check
          %p258 = pneg %p70
        $region14: #{tpu_custom_call.1} parent=11 // pred_check_branch
          %260 = sbr.rel (%p258) target = $region16
        $region15: #{tpu_custom_call.1} parent=11 // pred_region
          _
        $region16: #{tpu_custom_call.1} parent=11 // pred_fallthru
          _
        // Predicated region
        $region17: #{tpu_custom_call.1} parent=11 // pred_check
          %p261 = pneg %p91
        $region18: #{tpu_custom_call.1} parent=11 // pred_check_branch
          %263 = sbr.rel (%p261) target = $region20
        $region19: #{tpu_custom_call.1} parent=11 // pred_region
          _
        $region20: #{tpu_custom_call.1} parent=11 // pred_fallthru
          _
        // Predicated region
        $region21: #{tpu_custom_call.1} parent=11 // pred_check
          %p264 = pneg %p112
        $region22: #{tpu_custom_call.1} parent=11 // pred_check_branch
          %266 = sbr.rel (%p264) target = $region24
        $region23: #{tpu_custom_call.1} parent=11 // pred_region
          _
        $region24: #{tpu_custom_call.1} parent=11 // pred_fallthru
          _
        // Predicated region
        $region25: #{tpu_custom_call.1} parent=11 // pred_check
          %p267 = pneg %p133
        $region26: #{tpu_custom_call.1} parent=11 // pred_check_branch
          %269 = sbr.rel (%p267) target = $region28
        $region27: #{tpu_custom_call.1} parent=11 // pred_region
          _
        $region28: #{tpu_custom_call.1} parent=11 // pred_fallthru
          _
        // Predicated region
        $region29: #{tpu_custom_call.1} parent=11 // pred_check
          %p270 = pneg %p154
        $region30: #{tpu_custom_call.1} parent=11 // pred_check_branch
          %272 = sbr.rel (%p270) target = $region32
        $region31: #{tpu_custom_call.1} parent=11 // pred_region
          _
        $region32: #{tpu_custom_call.1} parent=11 // pred_fallthru
          _
        // Predicated region
        $region33: #{tpu_custom_call.1} parent=11 // pred_check
          %p273 = pneg %p175
        $region34: #{tpu_custom_call.1} parent=11 // pred_check_branch
          %275 = sbr.rel (%p273) target = $region36
        $region35: #{tpu_custom_call.1} parent=11 // pred_region
          _
        $region36: #{tpu_custom_call.1} parent=11 // pred_fallthru
          _
        // Predicated region
        $region37: #{tpu_custom_call.1} parent=11 // pred_check
          %p276 = pneg %p196
        $region38: #{tpu_custom_call.1} parent=11 // pred_check_branch
          %278 = sbr.rel (%p276) target = $region40
        $region39: #{tpu_custom_call.1} parent=11 // pred_region
          _
        $region40: #{tpu_custom_call.1} parent=11 // pred_fallthru
          _
        // Predicated region
        $region41: #{tpu_custom_call.1} parent=11 // pred_check
          %p279 = pneg %p217
        $region42: #{tpu_custom_call.1} parent=11 // pred_check_branch
          %281 = sbr.rel (%p279) target = $region44
        $region43: #{tpu_custom_call.1} parent=11 // pred_region
          _
        $region44: #{tpu_custom_call.1} parent=11 // pred_fallthru
          _
      $region12: #{tpu_custom_call.1} parent=5 // pred_fallthru
        _
      %p282 = scmp.lt.s32.totalorder %s23, 2
      // Predicated region
      $region45: #{tpu_custom_call.1} parent=5 // pred_check
        %p283 = pneg %p282
      $region46: #{tpu_custom_call.1} parent=5 // pred_check_branch
        %285 = sbr.rel (%p283) target = $region48
      $region47: #{tpu_custom_call.1} parent=5 // pred_region
        // Predicated region
        $region49: #{tpu_custom_call.1} parent=47 // pred_check
          %p286 = pneg %p43
        $region50: #{tpu_custom_call.1} parent=47 // pred_check_branch
          %288 = sbr.rel (%p286) target = $region52
        $region51: #{tpu_custom_call.1} parent=47 // pred_region
          %s289 = sand.u32 %s33, 1
          %s290 = scalar_lea.sflag [#allocation4], %s289
          %s291 = sand.u32 %s33, 1
          %s292 = smul.addr %s291, 8
          %s293 = scalar_lea.vmem [#allocation3], %s292
          %s294 = smul.u32 2, %s23
          %s296 = ssub.s32 128, 128
          %297 = vsyncadd %s290, %s296
          %s298 = smul.addr %s294, 64
          %s299 = scalar_lea.hbm %s0, %s298
          %s301 = sshll.u32 %s293, 4
          %s302 = int_to_ptr.vmem [resolvable:$true] %s301
          %304 = dma.hbm_to_vmem [thread:$0]  %s299, 128, %s302, %s290
        $region52: #{tpu_custom_call.1} parent=47 // pred_fallthru
          _
      $region48: #{tpu_custom_call.1} parent=5 // pred_fallthru
        _
      %p305 = scmp.le.s32.totalorder 1, %s23
      %p306 = scmp.lt.s32.totalorder %s23, 3
      %p307 = pnand %p305, %p306
      %p308 = pneg %p307
      // Predicated region
      $region53: #{tpu_custom_call.1} parent=5 // pred_check
        _
      $region54: #{tpu_custom_call.1} parent=5 // pred_check_branch
        %310 = sbr.rel (%p307) target = $region56
      $region55: #{tpu_custom_call.1} parent=5 // pred_region
        %s311 = ssub.s32 %s23, 1
        %s312 = sand.u32 %s36, 1
        %s313 = scalar_lea.sflag [#allocation4], %s312
        %s314 = sand.u32 %s36, 1
        %s315 = smul.addr %s314, 8
        %s316 = scalar_lea.vmem [#allocation3], %s315
        // Predicated region
        $region57: #{tpu_custom_call.1} parent=55 // pred_check
          %p317 = pneg %p49
        $region58: #{tpu_custom_call.1} parent=55 // pred_check_branch
          %319 = sbr.rel (%p317) target = $region60
        $region59: #{tpu_custom_call.1} parent=55 // pred_region
          %320 = dma.done %s313, 128
        $region60: #{tpu_custom_call.1} parent=55 // pred_fallthru
          _
        %s321 = sand.u32 %s36, 1
        %s322 = scalar_lea.sflag [#allocation4], %s321
        %s323 = sand.u32 %s36, 1
        %s324 = smul.addr %s323, 8
        %s325 = scalar_lea.vmem [#allocation3], %s324
        %p326 = pneg %p49
        %p327 = pneg %p46
        %p328 = pneg %p70
        %p329 = pneg %p67
        %p330 = pneg %p91
        %p331 = pneg %p88
        %p332 = pneg %p112
        %p333 = pneg %p109
        %p334 = pneg %p133
        %p335 = pneg %p130
        %p336 = pneg %p154
        %p337 = pneg %p151
        %p338 = pneg %p175
        %p339 = pneg %p172
        %p340 = pneg %p196
        %p341 = pneg %p193
        %p342 = pneg %p217
        %p343 = pneg %p214
        %p344 = pneg %p243
        %p345 = pneg %p240
        %s346 = sand.u32 %s230, 1
        %s347 = scalar_lea.sflag [#allocation5], %s346
        %s348 = sand.u32 %s230, 1
        %s349 = smul.addr %s348, 8
        %s350 = scalar_lea.vmem [#allocation6], %s349
        %s351 = smul.u32 2, %s28
        %s352 = smul.u32 2, %s28
        %v353 = vld [vmem:[%s316] sm:$0xff]
        %v354 = vld [vmem:[%s1] sm:$0xff]
        %v355 = vld [vmem:[%s1 + $0x8] sm:$0xff]
        %v356 = vld [vmem:[%s1 + $0x10] sm:$0xff]
        %v357 = vld [vmem:[%s1 + $0x18] sm:$0xff]
        %v358 = vld [vmem:[%s1 + $0x20] sm:$0xff]
        %v359 = vld [vmem:[%s1 + $0x28] sm:$0xff]
        %v360 = vld [vmem:[%s1 + $0x30] sm:$0xff]
        %v361 = vld [vmem:[%s1 + $0x38] sm:$0xff]
        %v362 = vld [vmem:[%s1 + $0x40] sm:$0xf]
        %v363 = vld [vmem:[%s1 + $0x48] sm:$0xf]
        %v365 = vcombine.high %v353, %v353
        %367 = vrot.lane.b32.xlu0 %v353, 17
        %v368 = vpop.permute.xlu0 %367
        %369 = vrot.lane.b32.xlu0 %v365, 17
        %v370 = vpop.permute.xlu0 %369
        %v371 = vlaneseq
        %v372 = vand.u32 %v371, 127
        %vm373 = vcmp.lt.s32.totalorder %v372, 17
        %v374 = vsel %vm373, %v368, %v370
        %v375 = vsel %vm373, %v370, %v368
        %376 = vrot.lane.b32.xlu0 %v353, 16
        %v377 = vpop.permute.xlu0 %376
        %378 = vrot.lane.b32.xlu0 %v365, 16
        %v379 = vpop.permute.xlu0 %378
        %vm380 = vcmp.lt.s32.totalorder %v372, 16
        %v381 = vsel %vm380, %v377, %v379
        %v382 = vsel %vm380, %v379, %v377
        %383 = vrot.lane.b32.xlu0 %v353, 15
        %v384 = vpop.permute.xlu0 %383
        %385 = vrot.lane.b32.xlu0 %v365, 15
        %v386 = vpop.permute.xlu0 %385
        %vm387 = vcmp.lt.s32.totalorder %v372, 15
        %v388 = vsel %vm387, %v384, %v386
        %v389 = vsel %vm387, %v386, %v384
        %390 = vrot.lane.b32.xlu0 %v353, 1
        %v391 = vpop.permute.xlu0 %390
        %392 = vrot.lane.b32.xlu0 %v365, 1
        %v393 = vpop.permute.xlu0 %392
        %vm394 = vcmp.lt.s32.totalorder %v372, 1
        %v395 = vsel %vm394, %v391, %v393
        %v396 = vsel %vm394, %v393, %v391
        %397 = vrot.lane.b32.xlu0 %v353, 127
        %v398 = vpop.permute.xlu0 %397
        %399 = vrot.lane.b32.xlu0 %v365, 127
        %v400 = vpop.permute.xlu0 %399
        %vm401 = vcmp.lt.s32.totalorder %v372, 127
        %v402 = vsel %vm401, %v398, %v400
        %v403 = vsel %vm401, %v400, %v398
        %404 = vrot.lane.b32.xlu0 %v353, 113
        %v405 = vpop.permute.xlu0 %404
        %406 = vrot.lane.b32.xlu0 %v365, 113
        %v407 = vpop.permute.xlu0 %406
        %vm408 = vcmp.lt.s32.totalorder %v372, 113
        %v409 = vsel %vm408, %v405, %v407
        %v410 = vsel %vm408, %v407, %v405
        %411 = vrot.lane.b32.xlu0 %v353, 112
        %v412 = vpop.permute.xlu0 %411
        %413 = vrot.lane.b32.xlu0 %v365, 112
        %v414 = vpop.permute.xlu0 %413
        %vm415 = vcmp.lt.s32.totalorder %v372, 112
        %v416 = vsel %vm415, %v412, %v414
        %v417 = vsel %vm415, %v414, %v412
        %418 = vrot.lane.b32.xlu0 %v353, 111
        %v419 = vpop.permute.xlu0 %418
        %420 = vrot.lane.b32.xlu0 %v365, 111
        %v421 = vpop.permute.xlu0 %420
        %vm422 = vcmp.lt.s32.totalorder %v372, 111
        %v423 = vsel %vm422, %v419, %v421
        %v424 = vsel %vm422, %v421, %v419
        %v427 = vrot.slane %v382, 4
        %v428 = vrot.slane %v381, 4
        %v433 = vrot.slane %v396, 4
        %v434 = vrot.slane %v395, 4
        %v439 = vrot.slane %v402, 4
        %v440 = vrot.slane %v403, 4
        %v445 = vrot.slane %v416, 4
        %v446 = vrot.slane %v417, 4
        %vm449 = vcmask 1043456
        %v450 = vsel %vm449, %v375, %v427
        %v451 = vsel %vm449, %v374, %v428
        %v452 = vsel %vm449, %v389, %v433
        %v453 = vsel %vm449, %v388, %v434
        %v454 = vsel %vm449, %v353, %v439
        %v455 = vsel %vm449, %v365, %v440
        %v456 = vsel %vm449, %v409, %v445
        %v457 = vsel %vm449, %v410, %v446
        %v458 = vmul.f32 %v450, %v354
        %v459 = vmul.f32 %v451, %v355
        %v460 = vmul.f32 %v452, %v356
        %v461 = vmul.f32 %v453, %v357
        %v462 = vmul.f32 %v454, %v358
        %v463 = vmul.f32 %v455, %v359
        %v464 = vmul.f32 %v456, %v360
        %v465 = vmul.f32 %v457, %v361
        %v466 = vmul.f32 %v423, %v362
        %v467 = vmul.f32 %v424, %v363
        %v468 = vld [vmem:[%s2] sm:$0x1f]
        %vm469 = vcmask 293888
        %v471 = vsel %vm469, %v468, 0
        %v474 = vsel %vm449, %v466, 0
        %v477 = vsel %vm449, %v467, 0
        %479 = vmatprep.subr.mxu0 %v459
        %480 = vmatpush1.msra.mxu0 %v458
        %481 = vmatprep.subr.mxu0 %v461
        %482 = vmatpush1.msra.mxu0 %v460
        %483 = vmatprep.subr.mxu0 %v463
        %484 = vmatpush1.msra.mxu0 %v462
        %485 = vmatprep.subr.mxu0 %v465
        %486 = vmatpush1.msra.mxu0 %v464
        %487 = vmatprep.subr.mxu0 %v477
        %488 = vmatpush1.msra.mxu0 %v474
        %489 = vmatprep.subr.mxu0 0.0
        %490 = vmatpush1.msra.mxu0 0.0
        %491 = vmatprep.subr.mxu0 0.0
        %492 = vmatpush1.msra.mxu0 0.0
        %493 = vmatprep.subr.mxu0 0.0
        %494 = vmatpush1.msra.mxu0 0.0
        %495 = vmatprep.subr.mxu0 0.0
        %496 = vmatpush1.msra.mxu0 0.0
        %497 = vmatprep.subr.mxu0 0.0
        %498 = vmatpush1.msra.mxu0 0.0
        %499 = vmatprep.subr.mxu0 0.0
        %500 = vmatpush1.msra.mxu0 0.0
        %501 = vmatprep.subr.mxu0 0.0
        %502 = vmatpush1.msra.mxu0 0.0
        %503 = vmatprep.subr.mxu0 0.0
        %504 = vmatpush1.msra.mxu0 0.0
        %505 = vmatprep.subr.mxu0 0.0
        %506 = vmatpush1.msra.mxu0 0.0
        %507 = vmatprep.subr.mxu0 0.0
        %508 = vmatpush1.msra.mxu0 0.0
        %509 = vmatprep.subr.mxu0 0.0
        %510 = vmatpush1.msra.mxu0 0.0
        %511 = vmatprep.subr.mxu0 0.0
        %512 = vmatpush1.msra.mxu0 0.0
        %513 = vmatprep.subr.mxu0 0.0
        %514 = vmatpush1.msra.mxu0 0.0
        %515 = vmatprep.subr.mxu0 0.0
        %516 = vmatpush1.msra.mxu0 0.0
        %517 = vmatprep.subr.mxu0 0.0
        %518 = vmatpush1.msra.mxu0 0.0
        %519 = vmatprep.subr.mxu0 0.0
        %520 = vmatpush1.msra.mxu0 0.0
        %521 = vmatprep.subr.mxu0 0.0
        %522 = vmatpush1.msra.mxu0 0.0
        %523 = vmatprep.subr.mxu0 0.0
        %524 = vmatpush1.msra.mxu0 0.0
        %525 = vmatprep.subr.mxu0 0.0
        %526 = vmatpush1.msra.mxu0 0.0
        %527 = vmatprep.subr.mxu0 0.0
        %528 = vmatpush1.msra.mxu0 0.0
        %529 = vmatprep.subr.mxu0 0.0
        %530 = vmatpush1.msra.mxu0 0.0
        %531 = vmatprep.subr.mxu0 0.0
        %532 = vmatpush1.msra.mxu0 0.0
        %533 = vmatprep.subr.mxu0 0.0
        %534 = vmatpush1.msra.mxu0 0.0
        %535 = vmatprep.subr.mxu0 0.0
        %536 = vmatpush1.msra.mxu0 0.0
        %537 = vmatprep.subr.mxu0 0.0
        %538 = vmatpush1.msra.mxu0 0.0
        %539 = vmatprep.subr.mxu0 0.0
        %540 = vmatpush1.msra.mxu0 0.0
        %541 = vmatprep.subr.mxu0 0.0
        %542 = vmatpush1.msra.mxu0 0.0
        %543 = vmatprep.mubr.f32.mxu0 0.0
        %544 = vmatmul.mubr.f32.gmra.mrb[0].mxu0 %v471
        %v545 = vpop.f32.mrb[0].mxu0
        %v546 = vadd.f32 0.0, %v545
        %v547 = vpop.f32.mrb[0].mxu0
        %v548 = vadd.f32 0.0, %v547
        %549 = vdwg.mxu0
        %v550 = vld [vmem:[%s3] sm:$0xf]
        %552 = vset.pattern.permute.xlu0 0
        %553 = vperm.xlu0 %552, %v550
        %v554 = vpop.permute.xlu0 %553
        %v556 = vadd.f32 %v546, %v554
        %v557 = vadd.f32 %v548, %v554
        %v558 = vld [vmem:[%s4] sm:$0xf]
        %vm559 = vcmp.ge.f32.partialorder %v556, 0.0
        %vm560 = vcmp.ge.f32.partialorder %v557, 0.0
        %562 = vset.pattern.permute.xlu0 0
        %563 = vperm.xlu0 %562, %v558
        %v564 = vpop.permute.xlu0 %563
        %v566 = vmul.f32 %v564, %v556
        %v567 = vmul.f32 %v564, %v557
        %v568 = vsel %vm559, %v556, %v566
        %v569 = vsel %vm560, %v557, %v567
        %570 = vrot.lane.b32.xlu0 %v568, 17
        %v571 = vpop.permute.xlu0 %570
        %572 = vrot.lane.b32.xlu0 %v569, 17
        %v573 = vpop.permute.xlu0 %572
        %v574 = vsel %vm373, %v571, %v573
        %v575 = vsel %vm373, %v573, %v571
        %576 = vrot.lane.b32.xlu0 %v568, 16
        %v577 = vpop.permute.xlu0 %576
        %578 = vrot.lane.b32.xlu0 %v569, 16
        %v579 = vpop.permute.xlu0 %578
        %v580 = vsel %vm380, %v577, %v579
        %v581 = vsel %vm380, %v579, %v577
        %582 = vrot.lane.b32.xlu0 %v568, 15
        %v583 = vpop.permute.xlu0 %582
        %584 = vrot.lane.b32.xlu0 %v569, 15
        %v585 = vpop.permute.xlu0 %584
        %v586 = vsel %vm387, %v583, %v585
        %v587 = vsel %vm387, %v585, %v583
        %588 = vrot.lane.b32.xlu0 %v568, 1
        %v589 = vpop.permute.xlu0 %588
        %590 = vrot.lane.b32.xlu0 %v569, 1
        %v591 = vpop.permute.xlu0 %590
        %v592 = vsel %vm394, %v589, %v591
        %v593 = vsel %vm394, %v591, %v589
        %594 = vrot.lane.b32.xlu0 %v568, 127
        %v595 = vpop.permute.xlu0 %594
        %596 = vrot.lane.b32.xlu0 %v569, 127
        %v597 = vpop.permute.xlu0 %596
        %v598 = vsel %vm401, %v595, %v597
        %v599 = vsel %vm401, %v597, %v595
        %600 = vrot.lane.b32.xlu0 %v568, 113
        %v601 = vpop.permute.xlu0 %600
        %602 = vrot.lane.b32.xlu0 %v569, 113
        %v603 = vpop.permute.xlu0 %602
        %v604 = vsel %vm408, %v601, %v603
        %v605 = vsel %vm408, %v603, %v601
        %606 = vrot.lane.b32.xlu0 %v568, 112
        %v607 = vpop.permute.xlu0 %606
        %608 = vrot.lane.b32.xlu0 %v569, 112
        %v609 = vpop.permute.xlu0 %608
        %v610 = vsel %vm415, %v607, %v609
        %v611 = vsel %vm415, %v609, %v607
        %612 = vrot.lane.b32.xlu0 %v568, 111
        %v613 = vpop.permute.xlu0 %612
        %614 = vrot.lane.b32.xlu0 %v569, 111
        %v615 = vpop.permute.xlu0 %614
        %v616 = vsel %vm422, %v613, %v615
        %v617 = vsel %vm422, %v615, %v613
        %v620 = vrot.slane %v581, 4
        %v621 = vrot.slane %v580, 4
        %v626 = vrot.slane %v593, 4
        %v627 = vrot.slane %v592, 4
        %v632 = vrot.slane %v598, 4
        %v633 = vrot.slane %v599, 4
        %v638 = vrot.slane %v610, 4
        %v639 = vrot.slane %v611, 4
        %v642 = vsel %vm449, %v575, %v620
        %v643 = vsel %vm449, %v574, %v621
        %v644 = vsel %vm449, %v587, %v626
        %v645 = vsel %vm449, %v586, %v627
        %v646 = vsel %vm449, %v568, %v632
        %v647 = vsel %vm449, %v569, %v633
        %v648 = vsel %vm449, %v604, %v638
        %v649 = vsel %vm449, %v605, %v639
        %v650 = vmul.f32 %v642, %v354
        %v651 = vmul.f32 %v643, %v355
        %v652 = vmul.f32 %v644, %v356
        %v653 = vmul.f32 %v645, %v357
        %v654 = vmul.f32 %v646, %v358
        %v655 = vmul.f32 %v647, %v359
        %v656 = vmul.f32 %v648, %v360
        %v657 = vmul.f32 %v649, %v361
        %v658 = vmul.f32 %v616, %v362
        %v659 = vmul.f32 %v617, %v363
        %s660 = scalar_lea.vmem %s2, 8
        %v661 = vld [vmem:[%s660] sm:$0x1f]
        %v663 = vsel %vm469, %v661, 0
        %v666 = vsel %vm449, %v658, 0
        %v669 = vsel %vm449, %v659, 0
        %671 = vmatprep.subr.mxu0 %v651
        %672 = vmatpush1.msra.mxu0 %v650
        %673 = vmatprep.subr.mxu0 %v653
        %674 = vmatpush1.msra.mxu0 %v652
        %675 = vmatprep.subr.mxu0 %v655
        %676 = vmatpush1.msra.mxu0 %v654
        %677 = vmatprep.subr.mxu0 %v657
        %678 = vmatpush1.msra.mxu0 %v656
        %679 = vmatprep.subr.mxu0 %v669
        %680 = vmatpush1.msra.mxu0 %v666
        %681 = vmatprep.subr.mxu0 0.0
        %682 = vmatpush1.msra.mxu0 0.0
        %683 = vmatprep.subr.mxu0 0.0
        %684 = vmatpush1.msra.mxu0 0.0
        %685 = vmatprep.subr.mxu0 0.0
        %686 = vmatpush1.msra.mxu0 0.0
        %687 = vmatprep.subr.mxu0 0.0
        %688 = vmatpush1.msra.mxu0 0.0
        %689 = vmatprep.subr.mxu0 0.0
        %690 = vmatpush1.msra.mxu0 0.0
        %691 = vmatprep.subr.mxu0 0.0
        %692 = vmatpush1.msra.mxu0 0.0
        %693 = vmatprep.subr.mxu0 0.0
        %694 = vmatpush1.msra.mxu0 0.0
        %695 = vmatprep.subr.mxu0 0.0
        %696 = vmatpush1.msra.mxu0 0.0
        %697 = vmatprep.subr.mxu0 0.0
        %698 = vmatpush1.msra.mxu0 0.0
        %699 = vmatprep.subr.mxu0 0.0
        %700 = vmatpush1.msra.mxu0 0.0
        %701 = vmatprep.subr.mxu0 0.0
        %702 = vmatpush1.msra.mxu0 0.0
        %703 = vmatprep.subr.mxu0 0.0
        %704 = vmatpush1.msra.mxu0 0.0
        %705 = vmatprep.subr.mxu0 0.0
        %706 = vmatpush1.msra.mxu0 0.0
        %707 = vmatprep.subr.mxu0 0.0
        %708 = vmatpush1.msra.mxu0 0.0
        %709 = vmatprep.subr.mxu0 0.0
        %710 = vmatpush1.msra.mxu0 0.0
        %711 = vmatprep.subr.mxu0 0.0
        %712 = vmatpush1.msra.mxu0 0.0
        %713 = vmatprep.subr.mxu0 0.0
        %714 = vmatpush1.msra.mxu0 0.0
        %715 = vmatprep.subr.mxu0 0.0
        %716 = vmatpush1.msra.mxu0 0.0
        %717 = vmatprep.subr.mxu0 0.0
        %718 = vmatpush1.msra.mxu0 0.0
        %719 = vmatprep.subr.mxu0 0.0
        %720 = vmatpush1.msra.mxu0 0.0
        %721 = vmatprep.subr.mxu0 0.0
        %722 = vmatpush1.msra.mxu0 0.0
        %723 = vmatprep.subr.mxu0 0.0
        %724 = vmatpush1.msra.mxu0 0.0
        %725 = vmatprep.subr.mxu0 0.0
        %726 = vmatpush1.msra.mxu0 0.0
        %727 = vmatprep.subr.mxu0 0.0
        %728 = vmatpush1.msra.mxu0 0.0
        %729 = vmatprep.subr.mxu0 0.0
        %730 = vmatpush1.msra.mxu0 0.0
        %731 = vmatprep.subr.mxu0 0.0
        %732 = vmatpush1.msra.mxu0 0.0
        %733 = vmatprep.subr.mxu0 0.0
        %734 = vmatpush1.msra.mxu0 0.0
        %735 = vmatprep.mubr.f32.mxu0 0.0
        %736 = vmatmul.mubr.f32.gmra.mrb[0].mxu0 %v663
        %v737 = vpop.f32.mrb[0].mxu0
        %v738 = vadd.f32 0.0, %v737
        %v739 = vpop.f32.mrb[0].mxu0
        %v740 = vadd.f32 0.0, %v739
        %741 = vdwg.mxu0
        %s742 = scalar_lea.vmem %s3, 4
        %v743 = vld [vmem:[%s742] sm:$0xf]
        %745 = vset.pattern.permute.xlu0 0
        %746 = vperm.xlu0 %745, %v743
        %v747 = vpop.permute.xlu0 %746
        %v749 = vadd.f32 %v738, %v747
        %v750 = vadd.f32 %v740, %v747
        %s751 = scalar_lea.vmem %s4, 4
        %v752 = vld [vmem:[%s751] sm:$0xf]
        %vm753 = vcmp.ge.f32.partialorder %v749, 0.0
        %vm754 = vcmp.ge.f32.partialorder %v750, 0.0
        %756 = vset.pattern.permute.xlu0 0
        %757 = vperm.xlu0 %756, %v752
        %v758 = vpop.permute.xlu0 %757
        %v760 = vmul.f32 %v758, %v749
        %v761 = vmul.f32 %v758, %v750
        %v762 = vsel %vm753, %v749, %v760
        %v763 = vsel %vm754, %v750, %v761
        %764 = vrot.lane.b32.xlu0 %v762, 17
        %v765 = vpop.permute.xlu0 %764
        %766 = vrot.lane.b32.xlu0 %v763, 17
        %v767 = vpop.permute.xlu0 %766
        %v768 = vsel %vm373, %v765, %v767
        %v769 = vsel %vm373, %v767, %v765
        %770 = vrot.lane.b32.xlu0 %v762, 16
        %v771 = vpop.permute.xlu0 %770
        %772 = vrot.lane.b32.xlu0 %v763, 16
        %v773 = vpop.permute.xlu0 %772
        %v774 = vsel %vm380, %v771, %v773
        %v775 = vsel %vm380, %v773, %v771
        %776 = vrot.lane.b32.xlu0 %v762, 15
        %v777 = vpop.permute.xlu0 %776
        %778 = vrot.lane.b32.xlu0 %v763, 15
        %v779 = vpop.permute.xlu0 %778
        %v780 = vsel %vm387, %v777, %v779
        %v781 = vsel %vm387, %v779, %v777
        %782 = vrot.lane.b32.xlu0 %v762, 1
        %v783 = vpop.permute.xlu0 %782
        %784 = vrot.lane.b32.xlu0 %v763, 1
        %v785 = vpop.permute.xlu0 %784
        %v786 = vsel %vm394, %v783, %v785
        %v787 = vsel %vm394, %v785, %v783
        %788 = vrot.lane.b32.xlu0 %v762, 127
        %v789 = vpop.permute.xlu0 %788
        %790 = vrot.lane.b32.xlu0 %v763, 127
        %v791 = vpop.permute.xlu0 %790
        %v792 = vsel %vm401, %v789, %v791
        %v793 = vsel %vm401, %v791, %v789
        %794 = vrot.lane.b32.xlu0 %v762, 113
        %v795 = vpop.permute.xlu0 %794
        %796 = vrot.lane.b32.xlu0 %v763, 113
        %v797 = vpop.permute.xlu0 %796
        %v798 = vsel %vm408, %v795, %v797
        %v799 = vsel %vm408, %v797, %v795
        %800 = vrot.lane.b32.xlu0 %v762, 112
        %v801 = vpop.permute.xlu0 %800
        %802 = vrot.lane.b32.xlu0 %v763, 112
        %v803 = vpop.permute.xlu0 %802
        %v804 = vsel %vm415, %v801, %v803
        %v805 = vsel %vm415, %v803, %v801
        %806 = vrot.lane.b32.xlu0 %v762, 111
        %v807 = vpop.permute.xlu0 %806
        %808 = vrot.lane.b32.xlu0 %v763, 111
        %v809 = vpop.permute.xlu0 %808
        %v810 = vsel %vm422, %v807, %v809
        %v811 = vsel %vm422, %v809, %v807
        %v814 = vrot.slane %v775, 4
        %v815 = vrot.slane %v774, 4
        %v820 = vrot.slane %v787, 4
        %v821 = vrot.slane %v786, 4
        %v826 = vrot.slane %v792, 4
        %v827 = vrot.slane %v793, 4
        %v832 = vrot.slane %v804, 4
        %v833 = vrot.slane %v805, 4
        %v836 = vsel %vm449, %v769, %v814
        %v837 = vsel %vm449, %v768, %v815
        %v838 = vsel %vm449, %v781, %v820
        %v839 = vsel %vm449, %v780, %v821
        %v840 = vsel %vm449, %v762, %v826
        %v841 = vsel %vm449, %v763, %v827
        %v842 = vsel %vm449, %v798, %v832
        %v843 = vsel %vm449, %v799, %v833
        %v844 = vmul.f32 %v836, %v354
        %v845 = vmul.f32 %v837, %v355
        %v846 = vmul.f32 %v838, %v356
        %v847 = vmul.f32 %v839, %v357
        %v848 = vmul.f32 %v840, %v358
        %v849 = vmul.f32 %v841, %v359
        %v850 = vmul.f32 %v842, %v360
        %v851 = vmul.f32 %v843, %v361
        %v852 = vmul.f32 %v810, %v362
        %v853 = vmul.f32 %v811, %v363
        %s854 = scalar_lea.vmem %s2, 16
        %v855 = vld [vmem:[%s854] sm:$0x1f]
        %v857 = vsel %vm469, %v855, 0
        %v860 = vsel %vm449, %v852, 0
        %v863 = vsel %vm449, %v853, 0
        %865 = vmatprep.subr.mxu0 %v845
        %866 = vmatpush1.msra.mxu0 %v844
        %867 = vmatprep.subr.mxu0 %v847
        %868 = vmatpush1.msra.mxu0 %v846
        %869 = vmatprep.subr.mxu0 %v849
        %870 = vmatpush1.msra.mxu0 %v848
        %871 = vmatprep.subr.mxu0 %v851
        %872 = vmatpush1.msra.mxu0 %v850
        %873 = vmatprep.subr.mxu0 %v863
        %874 = vmatpush1.msra.mxu0 %v860
        %875 = vmatprep.subr.mxu0 0.0
        %876 = vmatpush1.msra.mxu0 0.0
        %877 = vmatprep.subr.mxu0 0.0
        %878 = vmatpush1.msra.mxu0 0.0
        %879 = vmatprep.subr.mxu0 0.0
        %880 = vmatpush1.msra.mxu0 0.0
        %881 = vmatprep.subr.mxu0 0.0
        %882 = vmatpush1.msra.mxu0 0.0
        %883 = vmatprep.subr.mxu0 0.0
        %884 = vmatpush1.msra.mxu0 0.0
        %885 = vmatprep.subr.mxu0 0.0
        %886 = vmatpush1.msra.mxu0 0.0
        %887 = vmatprep.subr.mxu0 0.0
        %888 = vmatpush1.msra.mxu0 0.0
        %889 = vmatprep.subr.mxu0 0.0
        %890 = vmatpush1.msra.mxu0 0.0
        %891 = vmatprep.subr.mxu0 0.0
        %892 = vmatpush1.msra.mxu0 0.0
        %893 = vmatprep.subr.mxu0 0.0
        %894 = vmatpush1.msra.mxu0 0.0
        %895 = vmatprep.subr.mxu0 0.0
        %896 = vmatpush1.msra.mxu0 0.0
        %897 = vmatprep.subr.mxu0 0.0
        %898 = vmatpush1.msra.mxu0 0.0
        %899 = vmatprep.subr.mxu0 0.0
        %900 = vmatpush1.msra.mxu0 0.0
        %901 = vmatprep.subr.mxu0 0.0
        %902 = vmatpush1.msra.mxu0 0.0
        %903 = vmatprep.subr.mxu0 0.0
        %904 = vmatpush1.msra.mxu0 0.0
        %905 = vmatprep.subr.mxu0 0.0
        %906 = vmatpush1.msra.mxu0 0.0
        %907 = vmatprep.subr.mxu0 0.0
        %908 = vmatpush1.msra.mxu0 0.0
        %909 = vmatprep.subr.mxu0 0.0
        %910 = vmatpush1.msra.mxu0 0.0
        %911 = vmatprep.subr.mxu0 0.0
        %912 = vmatpush1.msra.mxu0 0.0
        %913 = vmatprep.subr.mxu0 0.0
        %914 = vmatpush1.msra.mxu0 0.0
        %915 = vmatprep.subr.mxu0 0.0
        %916 = vmatpush1.msra.mxu0 0.0
        %917 = vmatprep.subr.mxu0 0.0
        %918 = vmatpush1.msra.mxu0 0.0
        %919 = vmatprep.subr.mxu0 0.0
        %920 = vmatpush1.msra.mxu0 0.0
        %921 = vmatprep.subr.mxu0 0.0
        %922 = vmatpush1.msra.mxu0 0.0
        %923 = vmatprep.subr.mxu0 0.0
        %924 = vmatpush1.msra.mxu0 0.0
        %925 = vmatprep.subr.mxu0 0.0
        %926 = vmatpush1.msra.mxu0 0.0
        %927 = vmatprep.subr.mxu0 0.0
        %928 = vmatpush1.msra.mxu0 0.0
        %929 = vmatprep.mubr.f32.mxu0 0.0
        %930 = vmatmul.mubr.f32.gmra.mrb[0].mxu0 %v857
        %v931 = vpop.f32.mrb[0].mxu0
        %v932 = vadd.f32 0.0, %v931
        %v933 = vpop.f32.mrb[0].mxu0
        %v934 = vadd.f32 0.0, %v933
        %935 = vdwg.mxu0
        %s936 = scalar_lea.vmem %s3, 8
        %v937 = vld [vmem:[%s936] sm:$0xf]
        %939 = vset.pattern.permute.xlu0 0
        %940 = vperm.xlu0 %939, %v937
        %v941 = vpop.permute.xlu0 %940
        %v943 = vadd.f32 %v932, %v941
        %v944 = vadd.f32 %v934, %v941
        %s945 = scalar_lea.vmem %s4, 8
        %v946 = vld [vmem:[%s945] sm:$0xf]
        %vm947 = vcmp.ge.f32.partialorder %v943, 0.0
        %vm948 = vcmp.ge.f32.partialorder %v944, 0.0
        %950 = vset.pattern.permute.xlu0 0
        %951 = vperm.xlu0 %950, %v946
        %v952 = vpop.permute.xlu0 %951
        %v954 = vmul.f32 %v952, %v943
        %v955 = vmul.f32 %v952, %v944
        %v956 = vsel %vm947, %v943, %v954
        %v957 = vsel %vm948, %v944, %v955
        %v960 = vrot.slane %v762, 4
        %v961 = vrot.slane %v763, 4
        %v964 = vsel %vm449, %v568, %v960
        %v965 = vsel %vm449, %v569, %v961
        %v966 = vld [vmem:[%s5] sm:$0xf]
        %v967 = vld [vmem:[%s6] sm:$0xf]
        %969 = vset.pattern.permute.xlu0 0
        %970 = vperm.xlu0 %969, %v967
        %v971 = vpop.permute.xlu0 %970
        %vm973 = vcmask 97280
        %v975 = vsel %vm973, %v966, 0
        %v978 = vsel %vm449, %v956, 0
        %v981 = vsel %vm449, %v957, 0
        %983 = vmatprep.subr.mxu0 %v965
        %984 = vmatpush1.msra.mxu0 %v964
        %985 = vmatprep.subr.mxu0 %v981
        %986 = vmatpush1.msra.mxu0 %v978
        %987 = vmatprep.subr.mxu0 0.0
        %988 = vmatpush1.msra.mxu0 0.0
        %989 = vmatprep.subr.mxu0 0.0
        %990 = vmatpush1.msra.mxu0 0.0
        %991 = vmatprep.subr.mxu0 0.0
        %992 = vmatpush1.msra.mxu0 0.0
        %993 = vmatprep.subr.mxu0 0.0
        %994 = vmatpush1.msra.mxu0 0.0
        %995 = vmatprep.subr.mxu0 0.0
        %996 = vmatpush1.msra.mxu0 0.0
        %997 = vmatprep.subr.mxu0 0.0
        %998 = vmatpush1.msra.mxu0 0.0
        %999 = vmatprep.subr.mxu0 0.0
        %1000 = vmatpush1.msra.mxu0 0.0
        %1001 = vmatprep.subr.mxu0 0.0
        %1002 = vmatpush1.msra.mxu0 0.0
        %1003 = vmatprep.subr.mxu0 0.0
        %1004 = vmatpush1.msra.mxu0 0.0
        %1005 = vmatprep.subr.mxu0 0.0
        %1006 = vmatpush1.msra.mxu0 0.0
        %1007 = vmatprep.subr.mxu0 0.0
        %1008 = vmatpush1.msra.mxu0 0.0
        %1009 = vmatprep.subr.mxu0 0.0
        %1010 = vmatpush1.msra.mxu0 0.0
        %1011 = vmatprep.subr.mxu0 0.0
        %1012 = vmatpush1.msra.mxu0 0.0
        %1013 = vmatprep.subr.mxu0 0.0
        %1014 = vmatpush1.msra.mxu0 0.0
        %1015 = vmatprep.subr.mxu0 0.0
        %1016 = vmatpush1.msra.mxu0 0.0
        %1017 = vmatprep.subr.mxu0 0.0
        %1018 = vmatpush1.msra.mxu0 0.0
        %1019 = vmatprep.subr.mxu0 0.0
        %1020 = vmatpush1.msra.mxu0 0.0
        %1021 = vmatprep.subr.mxu0 0.0
        %1022 = vmatpush1.msra.mxu0 0.0
        %1023 = vmatprep.subr.mxu0 0.0
        %1024 = vmatpush1.msra.mxu0 0.0
        %1025 = vmatprep.subr.mxu0 0.0
        %1026 = vmatpush1.msra.mxu0 0.0
        %1027 = vmatprep.subr.mxu0 0.0
        %1028 = vmatpush1.msra.mxu0 0.0
        %1029 = vmatprep.subr.mxu0 0.0
        %1030 = vmatpush1.msra.mxu0 0.0
        %1031 = vmatprep.subr.mxu0 0.0
        %1032 = vmatpush1.msra.mxu0 0.0
        %1033 = vmatprep.subr.mxu0 0.0
        %1034 = vmatpush1.msra.mxu0 0.0
        %1035 = vmatprep.subr.mxu0 0.0
        %1036 = vmatpush1.msra.mxu0 0.0
        %1037 = vmatprep.subr.mxu0 0.0
        %1038 = vmatpush1.msra.mxu0 0.0
        %1039 = vmatprep.subr.mxu0 0.0
        %1040 = vmatpush1.msra.mxu0 0.0
        %1041 = vmatprep.subr.mxu0 0.0
        %1042 = vmatpush1.msra.mxu0 0.0
        %1043 = vmatprep.subr.mxu0 0.0
        %1044 = vmatpush1.msra.mxu0 0.0
        %1045 = vmatprep.subr.mxu0 0.0
        %1046 = vmatpush1.msra.mxu0 0.0
        %1047 = vmatprep.mubr.f32.mxu0 0.0
        %1048 = vmatmul.mubr.f32.gmra.mrb[0].mxu0 %v975
        %v1049 = vpop.f32.mrb[0].mxu0
        %v1050 = vadd.f32 %v971, %v1049
        %v1051 = vpop.f32.mrb[0].mxu0
        %v1052 = vadd.f32 %v971, %v1051
        %1053 = vdwg.mxu0
        %v1054 = vld [vmem:[%s7] sm:$0xf]
        %vm1055 = vcmp.ge.f32.partialorder %v1050, 0.0
        %vm1056 = vcmp.ge.f32.partialorder %v1052, 0.0
        %1058 = vset.pattern.permute.xlu0 0
        %1059 = vperm.xlu0 %1058, %v1054
        %v1060 = vpop.permute.xlu0 %1059
        %v1062 = vmul.f32 %v1060, %v1050
        %v1063 = vmul.f32 %v1060, %v1052
        %v1064 = vsel %vm1055, %v1050, %v1062
        %v1065 = vsel %vm1056, %v1052, %v1063
        %v1066 = vld [vmem:[#allocation2] sm:$0x1]
        %1068 = vset.pattern.permute.xlu0 0
        %1069 = vperm.xlu0 %1068, %v1066
        %v1070 = vpop.permute.xlu0 %1069
        %v1072 = vlaneseq
        %v1073 = vshrl.u32 %v1072, 7
        %v1074 = vsub.s32 0, %v1073
        %v1075 = vrot.slane %v1070, %v1074
        %v1076 = vadd.f32 %v546, %v1075
        %v1077 = vadd.f32 %v548, %v1075
        %v1078 = vxor.u32 %v1076, 2147483648
        %v1079 = vxor.u32 %v1077, 2147483648
        %v1080 = vmul.f32 %v1078, 1.442695
        %v1081 = vpow.pop %v1080
        %v1082 = vmul.f32 %v1079, 1.442695
        %v1083 = vpow.pop %v1082
        %v1084 = vadd.f32 %v1081, 1.0
        %v1085 = vadd.f32 %v1083, 1.0
        %v1086 = vrcp.pop %v1084
        %v1087 = vmul.f32 1.0, %v1086
        %v1088 = vrcp.pop %v1085
        %v1089 = vmul.f32 1.0, %v1088
        %v1090 = vlaneseq
        %v1091 = vshrl.u32 %v1090, 7
        %v1092 = vsub.s32 4, %v1091
        %v1093 = vrot.slane %v1087, %v1092
        %v1094 = vlaneseq
        %v1095 = vshrl.u32 %v1094, 7
        %v1096 = vsub.s32 4, %v1095
        %v1097 = vrot.slane %v1089, %v1096
        %v1098 = vmul.f32 %v1064, %v1093
        %v1099 = vmul.f32 %v1065, %v1097
        %v1102 = vcombine.low %v1098, %v1099
        %1104 = vst [vmem:[%s350] sm:$0xff] %v1102
        %s1105 = sand.u32 %s230, 1
        %s1106 = scalar_lea.sflag [#allocation5], %s1105
        %s1107 = sand.u32 %s230, 1
        %s1108 = smul.addr %s1107, 8
        %s1109 = scalar_lea.vmem [#allocation6], %s1108
        // Predicated region
        $region61: #{tpu_custom_call.1} parent=55 // pred_check
          %p1110 = pneg %p240
        $region62: #{tpu_custom_call.1} parent=55 // pred_check_branch
          %1112 = sbr.rel (%p1110) target = $region64
        $region63: #{tpu_custom_call.1} parent=55 // pred_region
          %s1113 = smul.u32 2, %s28
          %s1115 = ssub.s32 128, 128
          %1116 = vsyncadd %s1106, %s1115
          %s1117 = smul.addr %s1113, 64
          %s1118 = scalar_lea.hbm %s9, %s1117
          %s1120 = sshll.u32 %s1109, 4
          %s1121 = int_to_ptr.vmem [resolvable:$true] %s1120
          %1123 = dma.vmem_to_hbm [thread:$0]  %s1121, 128, %s1118, %s1106
        $region64: #{tpu_custom_call.1} parent=55 // pred_fallthru
          _
      $region56: #{tpu_custom_call.1} parent=5 // pred_fallthru
        _
      %p1124 = scmp.le.s32.totalorder 2, %s23
      // Predicated region
      $region65: #{tpu_custom_call.1} parent=5 // pred_check
        %p1125 = pneg %p1124
      $region66: #{tpu_custom_call.1} parent=5 // pred_check_branch
        %1127 = sbr.rel (%p1125) target = $region68
      $region67: #{tpu_custom_call.1} parent=5 // pred_region
        %s1128 = ssub.s32 %s23, 2
        // Predicated region
        $region69: #{tpu_custom_call.1} parent=67 // pred_check
          %p1129 = pneg %p246
        $region70: #{tpu_custom_call.1} parent=67 // pred_check_branch
          %1131 = sbr.rel (%p1129) target = $region72
        $region71: #{tpu_custom_call.1} parent=67 // pred_region
          %s1132 = sand.u32 %s231, 1
          %s1133 = scalar_lea.sflag [#allocation5], %s1132
          %s1134 = sand.u32 %s231, 1
          %s1135 = smul.addr %s1134, 8
          %s1136 = scalar_lea.vmem [#allocation6], %s1135
          %1137 = dma.done %s1133, 128
        $region72: #{tpu_custom_call.1} parent=67 // pred_fallthru
          _
      $region68: #{tpu_custom_call.1} parent=5 // pred_fallthru
        _
    $region6: #{tpu_custom_call.1} parent=1 // loop_footer
      %s27 = sadd.s32 1, %s23
    $region7: #{tpu_custom_call.1} parent=1 // loop_footer_branch
      %22 = sbr.rel target = $region3
    $region8: #{tpu_custom_call.1} parent=1 // loop_exit
      _
    %1138 = vsyncpa [#allocation4], 1
    %s1139 = scalar_lea.sflag [#allocation4], 1
    %1140 = vsyncpa %s1139, 1
    %1141 = vsyncpa [#allocation5], 1
    %s1142 = scalar_lea.sflag [#allocation5], 1
    %1143 = vsyncpa %s1142, 1

</llo_original>
